<compile_context>
chip_gen: v5e
topology: v5e:2x2
jax: 0.10.0
libtpu: 0.0.40
codegen_flags: <defaults>
</compile_context>

<pallas_src>
import jax
import jax.numpy as jnp
from jax.experimental import pallas as pl
from jax.experimental.pallas import tpu as pltpu

N_CHARS = 64     # vocabulary size
EMB = 16         # embedding_size
HID = 32         # hidden_size
SEQ = 8          # sequence length
LANE = 128       # TPU lane width (padded output)


def char_lstm_kernel(ids_ref,                      # SMEM (T,) int32 (scalar prefetch)
                     emb_ref, wx_ref, wh_ref, b_ref, wy_ref, by_ref,
                     h0_ref, c0_ref,               # VMEM inputs
                     preds_ref, hT_ref, cT_ref,    # VMEM outputs
                     xs_ref, xp_ref, hs_ref):      # VMEM scratch
    T = xs_ref.shape[0]
    H = h0_ref.shape[1]

    # --- In-kernel embedding gather: 8 scalar-indexed row loads -------------
    for t in range(T):
        idx = ids_ref[t]                                        # SMEM scalar
        xs_ref[pl.ds(t, 1), :] = emb_ref[pl.ds(idx, 1), :]      # dynamic row load

    # --- Input-dependent half of gate pre-activations for all steps ---------
    # (T, E) @ (E, 4H) + (1, 4H); biases (already 0.5-prescaled for f/i/o).
    xp_ref[...] = (jnp.dot(xs_ref[...], wx_ref[...],
                           preferred_element_type=jnp.float32)
                   + b_ref[...])

    # Hoisted recurrent weight (bf16, 4H = one full lane width).
    wh = wh_ref[...]                                            # (H, 4H) bf16

    # Hoisted constant vregs for sigmoid-via-tanh:
    #   f/i/o lanes: act = 0.5*tanh(z/2) + 0.5   (== sigmoid(z))
    #   cell  lanes: act = tanh(z)
    scale = jnp.concatenate(
        [jnp.full((1, 3 * H), 0.5, jnp.float32),
         jnp.ones((1, H), jnp.float32)], axis=1)                # (1, 4H)
    shift = jnp.concatenate(
        [jnp.full((1, 3 * H), 0.5, jnp.float32),
         jnp.zeros((1, H), jnp.float32)], axis=1)               # (1, 4H)

    h = h0_ref[...]                                             # (1, H) f32
    c = c0_ref[...]                                             # (1, H) f32

    # --- Fully unrolled recurrence: one bf16 MXU op + one tanh per step -----
    for t in range(T):
        gates = xp_ref[pl.ds(t, 1), :] + jnp.dot(
            h.astype(jnp.bfloat16), wh, preferred_element_type=jnp.float32)
        act = jnp.tanh(gates) * scale + shift                   # (1, 4H)
        f = act[:, :H]
        ig = act[:, H:2 * H]
        o = act[:, 2 * H:3 * H]
        g = act[:, 3 * H:]
        c = f * c + ig * g
        h = o * jnp.tanh(c)
        hs_ref[pl.ds(t, 1), :] = h                              # static store

    # --- Deferred, lane-dense output projection ------------------------------
    # (T, H) @ (H, 128) + (1, 128) -> (T, 128): one unmasked bulk store.
    preds_ref[...] = (jnp.dot(hs_ref[...], wy_ref[...],
                              preferred_element_type=jnp.float32)
                      + by_ref[...])
    hT_ref[...] = h
    cT_ref[...] = c


def init_params(key, n_chars=N_CHARS, emb=EMB, hid=HID):
    """Raw per-gate parameters, mirroring the PyTorch module layout."""
    concat = emb + hid
    ks = jax.random.split(key, 11)
    scale = 0.1
    return {
        "embedding": jax.random.normal(ks[0], (n_chars, emb), jnp.float32) * scale,
        "wf": jax.random.normal(ks[1], (concat, hid), jnp.float32) * scale,
        "bf": jax.random.normal(ks[2], (hid,), jnp.float32) * scale,
        "wi": jax.random.normal(ks[3], (concat, hid), jnp.float32) * scale,
        "bi": jax.random.normal(ks[4], (hid,), jnp.float32) * scale,
        "wo": jax.random.normal(ks[5], (concat, hid), jnp.float32) * scale,
        "bo": jax.random.normal(ks[6], (hid,), jnp.float32) * scale,
        "wc": jax.random.normal(ks[7], (concat, hid), jnp.float32) * scale,
        "bc": jax.random.normal(ks[8], (hid,), jnp.float32) * scale,
        "wy": jax.random.normal(ks[9], (hid, n_chars), jnp.float32) * scale,
        "by": jax.random.normal(ks[10], (n_chars,), jnp.float32) * scale,
    }


def fuse_params(params):
    """One-time fusion/prescaling of kernel-ready tensors (do NOT call per step)."""
    w_fused = jnp.concatenate(
        [params["wf"], params["wi"], params["wo"], params["wc"]], axis=1)   # (E+H, 4H)
    b_fused = jnp.concatenate(
        [params["bf"], params["bi"], params["bo"], params["bc"]], axis=0)   # (4H,)

    # Pre-scale f/i/o columns by 0.5 so sigmoid(z) = 0.5*(1 + tanh(z/2)) becomes
    # a single full-vreg tanh in the kernel.
    col_scale = jnp.concatenate(
        [jnp.full((3 * HID,), 0.5, jnp.float32), jnp.ones((HID,), jnp.float32)])
    w_scaled = w_fused * col_scale[None, :]
    b_scaled = b_fused * col_scale

    wx = w_scaled[:EMB, :]                                   # (E, 4H) f32
    wh = w_scaled[EMB:, :].astype(jnp.bfloat16)              # (H, 4H) bf16 (MXU fast path)

    # Lane-dense (128-wide) output projection.
    wy_pad = jnp.zeros((HID, LANE), jnp.float32).at[:, :N_CHARS].set(params["wy"])
    by_pad = jnp.zeros((1, LANE), jnp.float32).at[0, :N_CHARS].set(params["by"])

    return {
        "embedding": params["embedding"],    # (n_chars, E)
        "wx": wx,
        "wh": wh,
        "b": b_scaled[None, :],              # (1, 4H)
        "wy": wy_pad,                        # (H, 128)
        "by": by_pad,                        # (1, 128)
    }


def char_lstm_forward(input_seq, fused, hidden=None, cell=None):
    """Matches CharLSTM.forward: returns (preds (T, n_chars), hidden (H,), cell (H,))."""
    T = input_seq.shape[0]
    if hidden is None:
        hidden = jnp.zeros((HID,), jnp.float32)
    if cell is None:
        cell = jnp.zeros((HID,), jnp.float32)

    vmem = pl.BlockSpec(memory_space=pltpu.MemorySpace.VMEM)

    preds_pad, hT, cT = pl.pallas_call(
        char_lstm_kernel,
        out_shape=(
            jax.ShapeDtypeStruct((T, LANE), jnp.float32),
            jax.ShapeDtypeStruct((1, HID), jnp.float32),
            jax.ShapeDtypeStruct((1, HID), jnp.float32),
        ),
        grid_spec=pltpu.PrefetchScalarGridSpec(
            num_scalar_prefetch=1,          # input_seq -> SMEM
            grid=(),                        # gridless, whole problem VMEM-resident
            in_specs=[vmem] * 8,
            out_specs=(vmem, vmem, vmem),
            scratch_shapes=[
                pltpu.VMEM((T, EMB), jnp.float32),       # gathered embeddings
                pltpu.VMEM((T, 4 * HID), jnp.float32),   # xproj staging
                pltpu.VMEM((T, HID), jnp.float32),       # hidden history
            ],
        ),
    )(
        input_seq.astype(jnp.int32),
        fused["embedding"],
        fused["wx"], fused["wh"], fused["b"],
        fused["wy"], fused["by"],
        hidden[None, :], cell[None, :],
    )
    return preds_pad[:, :N_CHARS], hT[0], cT[0]


def char_lstm_reference(input_seq, params, hidden=None, cell=None):
    """Pure-JAX reference mirroring the PyTorch module exactly (unfused weights)."""
    if hidden is None:
        hidden = jnp.zeros((HID,), jnp.float32)
    if cell is None:
        cell = jnp.zeros((HID,), jnp.float32)
    preds = []
    h, c = hidden, cell
    for t in range(input_seq.shape[0]):
        i = params["embedding"][input_seq[t]]
        z = jnp.concatenate([i, h], axis=0)
        f = jax.nn.sigmoid(z @ params["wf"] + params["bf"])
        ig = jax.nn.sigmoid(z @ params["wi"] + params["bi"])
        g = jnp.tanh(z @ params["wc"] + params["bc"])
        o = jax.nn.sigmoid(z @ params["wo"] + params["bo"])
        c = f * c + ig * g
        h = o * jnp.tanh(c)
        preds.append(h @ params["wy"] + params["by"])
    return jnp.stack(preds), h, c


if __name__ == "__main__":
    key = jax.random.PRNGKey(0)
    pkey, skey = jax.random.split(key)
    params = init_params(pkey)
    fused = fuse_params(params)          # one-time weight fusion / prescale

    input_seq = jax.random.randint(skey, (SEQ,), 0, N_CHARS, dtype=jnp.int32)

    preds, h_final, c_final = char_lstm_forward(input_seq, fused)
    jax.block_until_ready((preds, h_final, c_final))

    # Sanity-check against the pure-JAX reference. Tolerance relaxed because the
    # recurrent matmul uses bf16 operands (per the performance review).
    preds_ref, h_ref, c_ref = char_lstm_reference(input_seq, params)
    assert jnp.allclose(preds, preds_ref, atol=5e-3), "preds mismatch"
    assert jnp.allclose(h_final, h_ref, atol=5e-3), "hidden mismatch"
    assert jnp.allclose(c_final, c_ref, atol=5e-3), "cell mismatch"

    print("KERNEL_OK")
</pallas_src>

<mosaic_0001>
module attributes {stable_mosaic.version = 11 : i64} {
  func.func @char_lstm_kernel(%arg0: memref<8xi32, #tpu.memory_space<smem>>, %arg1: memref<64x16xf32, #tpu.memory_space<vmem>>, %arg2: memref<16x128xf32, #tpu.memory_space<vmem>>, %arg3: memref<32x128xbf16, #tpu.memory_space<vmem>>, %arg4: memref<1x128xf32, #tpu.memory_space<vmem>>, %arg5: memref<32x128xf32, #tpu.memory_space<vmem>>, %arg6: memref<1x128xf32, #tpu.memory_space<vmem>>, %arg7: memref<1x32xf32, #tpu.memory_space<vmem>>, %arg8: memref<1x32xf32, #tpu.memory_space<vmem>>, %arg9: memref<8x128xf32, #tpu.memory_space<vmem>>, %arg10: memref<1x32xf32, #tpu.memory_space<vmem>>, %arg11: memref<1x32xf32, #tpu.memory_space<vmem>>, %arg12: memref<8x16xf32, #tpu.memory_space<vmem>>, %arg13: memref<8x128xf32, #tpu.memory_space<vmem>>, %arg14: memref<8x32xf32, #tpu.memory_space<vmem>>) attributes {dimension_semantics = [], scalar_prefetch = 1 : i64, scratch_operands = 3 : i64, tpu.core_type = #tpu.core_type<tc>} {
    %c0 = arith.constant 0 : index
    %0 = memref.load %arg0[%c0] : memref<8xi32, #tpu.memory_space<smem>>
    %1 = arith.index_cast %0 : i32 to index
    %c0_0 = arith.constant 0 : index
    %2 = vector.load %arg1[%1, %c0_0] : memref<64x16xf32, #tpu.memory_space<vmem>>, vector<1x16xf32>
    %c0_1 = arith.constant 0 : index
    %c0_2 = arith.constant 0 : index
    %3 = vector.load %arg12[%c0_1, %c0_2] : memref<8x16xf32, #tpu.memory_space<vmem>>, vector<1x16xf32>
    tpu.vector_store %arg12[%c0_1, %c0_2], %2 {strides = array<i32>} : memref<8x16xf32, #tpu.memory_space<vmem>>, vector<1x16xf32>,
    %c1 = arith.constant 1 : index
    %4 = memref.load %arg0[%c1] : memref<8xi32, #tpu.memory_space<smem>>
    %5 = arith.index_cast %4 : i32 to index
    %c0_3 = arith.constant 0 : index
    %6 = vector.load %arg1[%5, %c0_3] : memref<64x16xf32, #tpu.memory_space<vmem>>, vector<1x16xf32>
    %c1_4 = arith.constant 1 : index
    %c0_5 = arith.constant 0 : index
    %7 = vector.load %arg12[%c1_4, %c0_5] : memref<8x16xf32, #tpu.memory_space<vmem>>, vector<1x16xf32>
    tpu.vector_store %arg12[%c1_4, %c0_5], %6 {strides = array<i32>} : memref<8x16xf32, #tpu.memory_space<vmem>>, vector<1x16xf32>,
    %c2 = arith.constant 2 : index
    %8 = memref.load %arg0[%c2] : memref<8xi32, #tpu.memory_space<smem>>
    %9 = arith.index_cast %8 : i32 to index
    %c0_6 = arith.constant 0 : index
    %10 = vector.load %arg1[%9, %c0_6] : memref<64x16xf32, #tpu.memory_space<vmem>>, vector<1x16xf32>
    %c2_7 = arith.constant 2 : index
    %c0_8 = arith.constant 0 : index
    %11 = vector.load %arg12[%c2_7, %c0_8] : memref<8x16xf32, #tpu.memory_space<vmem>>, vector<1x16xf32>
    tpu.vector_store %arg12[%c2_7, %c0_8], %10 {strides = array<i32>} : memref<8x16xf32, #tpu.memory_space<vmem>>, vector<1x16xf32>,
    %c3 = arith.constant 3 : index
    %12 = memref.load %arg0[%c3] : memref<8xi32, #tpu.memory_space<smem>>
    %13 = arith.index_cast %12 : i32 to index
    %c0_9 = arith.constant 0 : index
    %14 = vector.load %arg1[%13, %c0_9] : memref<64x16xf32, #tpu.memory_space<vmem>>, vector<1x16xf32>
    %c3_10 = arith.constant 3 : index
    %c0_11 = arith.constant 0 : index
    %15 = vector.load %arg12[%c3_10, %c0_11] : memref<8x16xf32, #tpu.memory_space<vmem>>, vector<1x16xf32>
    tpu.vector_store %arg12[%c3_10, %c0_11], %14 {strides = array<i32>} : memref<8x16xf32, #tpu.memory_space<vmem>>, vector<1x16xf32>,
    %c4 = arith.constant 4 : index
    %16 = memref.load %arg0[%c4] : memref<8xi32, #tpu.memory_space<smem>>
    %17 = arith.index_cast %16 : i32 to index
    %c0_12 = arith.constant 0 : index
    %18 = vector.load %arg1[%17, %c0_12] : memref<64x16xf32, #tpu.memory_space<vmem>>, vector<1x16xf32>
    %c4_13 = arith.constant 4 : index
    %c0_14 = arith.constant 0 : index
    %19 = vector.load %arg12[%c4_13, %c0_14] : memref<8x16xf32, #tpu.memory_space<vmem>>, vector<1x16xf32>
    tpu.vector_store %arg12[%c4_13, %c0_14], %18 {strides = array<i32>} : memref<8x16xf32, #tpu.memory_space<vmem>>, vector<1x16xf32>,
    %c5 = arith.constant 5 : index
    %20 = memref.load %arg0[%c5] : memref<8xi32, #tpu.memory_space<smem>>
    %21 = arith.index_cast %20 : i32 to index
    %c0_15 = arith.constant 0 : index
    %22 = vector.load %arg1[%21, %c0_15] : memref<64x16xf32, #tpu.memory_space<vmem>>, vector<1x16xf32>
    %c5_16 = arith.constant 5 : index
    %c0_17 = arith.constant 0 : index
    %23 = vector.load %arg12[%c5_16, %c0_17] : memref<8x16xf32, #tpu.memory_space<vmem>>, vector<1x16xf32>
    tpu.vector_store %arg12[%c5_16, %c0_17], %22 {strides = array<i32>} : memref<8x16xf32, #tpu.memory_space<vmem>>, vector<1x16xf32>,
    %c6 = arith.constant 6 : index
    %24 = memref.load %arg0[%c6] : memref<8xi32, #tpu.memory_space<smem>>
    %25 = arith.index_cast %24 : i32 to index
    %c0_18 = arith.constant 0 : index
    %26 = vector.load %arg1[%25, %c0_18] : memref<64x16xf32, #tpu.memory_space<vmem>>, vector<1x16xf32>
    %c6_19 = arith.constant 6 : index
    %c0_20 = arith.constant 0 : index
    %27 = vector.load %arg12[%c6_19, %c0_20] : memref<8x16xf32, #tpu.memory_space<vmem>>, vector<1x16xf32>
    tpu.vector_store %arg12[%c6_19, %c0_20], %26 {strides = array<i32>} : memref<8x16xf32, #tpu.memory_space<vmem>>, vector<1x16xf32>,
    %c7 = arith.constant 7 : index
    %28 = memref.load %arg0[%c7] : memref<8xi32, #tpu.memory_space<smem>>
    %29 = arith.index_cast %28 : i32 to index
    %c0_21 = arith.constant 0 : index
    %30 = vector.load %arg1[%29, %c0_21] : memref<64x16xf32, #tpu.memory_space<vmem>>, vector<1x16xf32>
    %c7_22 = arith.constant 7 : index
    %c0_23 = arith.constant 0 : index
    %31 = vector.load %arg12[%c7_22, %c0_23] : memref<8x16xf32, #tpu.memory_space<vmem>>, vector<1x16xf32>
    tpu.vector_store %arg12[%c7_22, %c0_23], %30 {strides = array<i32>} : memref<8x16xf32, #tpu.memory_space<vmem>>, vector<1x16xf32>,
    %c0_24 = arith.constant 0 : index
    %c0_25 = arith.constant 0 : index
    %32 = vector.load %arg12[%c0_24, %c0_25] : memref<8x16xf32, #tpu.memory_space<vmem>>, vector<8x16xf32>
    %c0_26 = arith.constant 0 : index
    %c0_27 = arith.constant 0 : index
    %33 = vector.load %arg2[%c0_26, %c0_27] : memref<16x128xf32, #tpu.memory_space<vmem>>, vector<16x128xf32>
    %cst = arith.constant dense<0.000000e+00> : vector<8x128xf32>
    %34 = tpu.matmul %32, %33, %cst {dimension_numbers = #tpu.dot_dimension_numbers<[1], [0], [0], [1], [0, 0, 1, 1], [], []>} : vector<8x16xf32>, vector<16x128xf32>, vector<8x128xf32> -> vector<8x128xf32>
    %c0_28 = arith.constant 0 : index
    %c0_29 = arith.constant 0 : index
    %35 = vector.load %arg4[%c0_28, %c0_29] : memref<1x128xf32, #tpu.memory_space<vmem>>, vector<1x128xf32>
    %36 = vector.broadcast %35 : vector<1x128xf32> to vector<8x128xf32>
    %37 = arith.addf %34, %36 : vector<8x128xf32>
    %c0_30 = arith.constant 0 : index
    %c0_31 = arith.constant 0 : index
    %38 = vector.load %arg13[%c0_30, %c0_31] : memref<8x128xf32, #tpu.memory_space<vmem>>, vector<8x128xf32>
    tpu.vector_store %arg13[%c0_30, %c0_31], %37 {strides = array<i32>} : memref<8x128xf32, #tpu.memory_space<vmem>>, vector<8x128xf32>,
    %c0_32 = arith.constant 0 : index
    %c0_33 = arith.constant 0 : index
    %39 = vector.load %arg3[%c0_32, %c0_33] : memref<32x128xbf16, #tpu.memory_space<vmem>>, vector<32x128xbf16>
    %cst_34 = arith.constant 5.000000e-01 : f32
    %40 = vector.broadcast %cst_34 : f32 to vector<1x96xf32>
    %cst_35 = arith.constant 1.000000e+00 : f32
    %41 = vector.broadcast %cst_35 : f32 to vector<1x32xf32>
    %42 = tpu.concatenate %40, %41 in 1 : vector<1x96xf32>, vector<1x32xf32> -> vector<1x128xf32>
    %cst_36 = arith.constant 5.000000e-01 : f32
    %43 = vector.broadcast %cst_36 : f32 to vector<1x96xf32>
    %cst_37 = arith.constant 0.000000e+00 : f32
    %44 = vector.broadcast %cst_37 : f32 to vector<1x32xf32>
    %45 = tpu.concatenate %43, %44 in 1 : vector<1x96xf32>, vector<1x32xf32> -> vector<1x128xf32>
    %c0_38 = arith.constant 0 : index
    %c0_39 = arith.constant 0 : index
    %46 = vector.load %arg7[%c0_38, %c0_39] : memref<1x32xf32, #tpu.memory_space<vmem>>, vector<1x32xf32>
    %c0_40 = arith.constant 0 : index
    %c0_41 = arith.constant 0 : index
    %47 = vector.load %arg8[%c0_40, %c0_41] : memref<1x32xf32, #tpu.memory_space<vmem>>, vector<1x32xf32>
    %c0_42 = arith.constant 0 : index
    %c0_43 = arith.constant 0 : index
    %48 = vector.load %arg13[%c0_42, %c0_43] : memref<8x128xf32, #tpu.memory_space<vmem>>, vector<1x128xf32>
    %49 = arith.truncf %46 : vector<1x32xf32> to vector<1x32xbf16>
    %cst_44 = arith.constant dense<0.000000e+00> : vector<1x128xf32>
    %50 = tpu.matmul %49, %39, %cst_44 {dimension_numbers = #tpu.dot_dimension_numbers<[1], [0], [0], [1], [0, 0, 1, 1], [], []>} : vector<1x32xbf16>, vector<32x128xbf16>, vector<1x128xf32> -> vector<1x128xf32>
    %51 = arith.addf %48, %50 : vector<1x128xf32>
    %52 = math.tanh %51 : vector<1x128xf32>
    %53 = arith.mulf %52, %42 : vector<1x128xf32>
    %54 = arith.addf %53, %45 : vector<1x128xf32>
    %55 = vector.extract_strided_slice %54 {offsets = [0, 0], sizes = [1, 32], strides = [1, 1]} : vector<1x128xf32> to vector<1x32xf32>
    %56 = vector.extract_strided_slice %54 {offsets = [0, 32], sizes = [1, 32], strides = [1, 1]} : vector<1x128xf32> to vector<1x32xf32>
    %57 = vector.extract_strided_slice %54 {offsets = [0, 64], sizes = [1, 32], strides = [1, 1]} : vector<1x128xf32> to vector<1x32xf32>
    %58 = vector.extract_strided_slice %54 {offsets = [0, 96], sizes = [1, 32], strides = [1, 1]} : vector<1x128xf32> to vector<1x32xf32>
    %59 = arith.mulf %55, %47 : vector<1x32xf32>
    %60 = arith.mulf %56, %58 : vector<1x32xf32>
    %61 = arith.addf %59, %60 : vector<1x32xf32>
    %62 = math.tanh %61 : vector<1x32xf32>
    %63 = arith.mulf %57, %62 : vector<1x32xf32>
    %c0_45 = arith.constant 0 : index
    %c0_46 = arith.constant 0 : index
    %64 = vector.load %arg14[%c0_45, %c0_46] : memref<8x32xf32, #tpu.memory_space<vmem>>, vector<1x32xf32>
    tpu.vector_store %arg14[%c0_45, %c0_46], %63 {strides = array<i32>} : memref<8x32xf32, #tpu.memory_space<vmem>>, vector<1x32xf32>,
    %c1_47 = arith.constant 1 : index
    %c0_48 = arith.constant 0 : index
    %65 = vector.load %arg13[%c1_47, %c0_48] : memref<8x128xf32, #tpu.memory_space<vmem>>, vector<1x128xf32>
    %66 = arith.truncf %63 : vector<1x32xf32> to vector<1x32xbf16>
    %cst_49 = arith.constant dense<0.000000e+00> : vector<1x128xf32>
    %67 = tpu.matmul %66, %39, %cst_49 {dimension_numbers = #tpu.dot_dimension_numbers<[1], [0], [0], [1], [0, 0, 1, 1], [], []>} : vector<1x32xbf16>, vector<32x128xbf16>, vector<1x128xf32> -> vector<1x128xf32>
    %68 = arith.addf %65, %67 : vector<1x128xf32>
    %69 = math.tanh %68 : vector<1x128xf32>
    %70 = arith.mulf %69, %42 : vector<1x128xf32>
    %71 = arith.addf %70, %45 : vector<1x128xf32>
    %72 = vector.extract_strided_slice %71 {offsets = [0, 0], sizes = [1, 32], strides = [1, 1]} : vector<1x128xf32> to vector<1x32xf32>
    %73 = vector.extract_strided_slice %71 {offsets = [0, 32], sizes = [1, 32], strides = [1, 1]} : vector<1x128xf32> to vector<1x32xf32>
    %74 = vector.extract_strided_slice %71 {offsets = [0, 64], sizes = [1, 32], strides = [1, 1]} : vector<1x128xf32> to vector<1x32xf32>
    %75 = vector.extract_strided_slice %71 {offsets = [0, 96], sizes = [1, 32], strides = [1, 1]} : vector<1x128xf32> to vector<1x32xf32>
    %76 = arith.mulf %72, %61 : vector<1x32xf32>
    %77 = arith.mulf %73, %75 : vector<1x32xf32>
    %78 = arith.addf %76, %77 : vector<1x32xf32>
    %79 = math.tanh %78 : vector<1x32xf32>
    %80 = arith.mulf %74, %79 : vector<1x32xf32>
    %c1_50 = arith.constant 1 : index
    %c0_51 = arith.constant 0 : index
    %81 = vector.load %arg14[%c1_50, %c0_51] : memref<8x32xf32, #tpu.memory_space<vmem>>, vector<1x32xf32>
    tpu.vector_store %arg14[%c1_50, %c0_51], %80 {strides = array<i32>} : memref<8x32xf32, #tpu.memory_space<vmem>>, vector<1x32xf32>,
    %c2_52 = arith.constant 2 : index
    %c0_53 = arith.constant 0 : index
    %82 = vector.load %arg13[%c2_52, %c0_53] : memref<8x128xf32, #tpu.memory_space<vmem>>, vector<1x128xf32>
    %83 = arith.truncf %80 : vector<1x32xf32> to vector<1x32xbf16>
    %cst_54 = arith.constant dense<0.000000e+00> : vector<1x128xf32>
    %84 = tpu.matmul %83, %39, %cst_54 {dimension_numbers = #tpu.dot_dimension_numbers<[1], [0], [0], [1], [0, 0, 1, 1], [], []>} : vector<1x32xbf16>, vector<32x128xbf16>, vector<1x128xf32> -> vector<1x128xf32>
    %85 = arith.addf %82, %84 : vector<1x128xf32>
    %86 = math.tanh %85 : vector<1x128xf32>
    %87 = arith.mulf %86, %42 : vector<1x128xf32>
    %88 = arith.addf %87, %45 : vector<1x128xf32>
    %89 = vector.extract_strided_slice %88 {offsets = [0, 0], sizes = [1, 32], strides = [1, 1]} : vector<1x128xf32> to vector<1x32xf32>
    %90 = vector.extract_strided_slice %88 {offsets = [0, 32], sizes = [1, 32], strides = [1, 1]} : vector<1x128xf32> to vector<1x32xf32>
    %91 = vector.extract_strided_slice %88 {offsets = [0, 64], sizes = [1, 32], strides = [1, 1]} : vector<1x128xf32> to vector<1x32xf32>
    %92 = vector.extract_strided_slice %88 {offsets = [0, 96], sizes = [1, 32], strides = [1, 1]} : vector<1x128xf32> to vector<1x32xf32>
    %93 = arith.mulf %89, %78 : vector<1x32xf32>
    %94 = arith.mulf %90, %92 : vector<1x32xf32>
    %95 = arith.addf %93, %94 : vector<1x32xf32>
    %96 = math.tanh %95 : vector<1x32xf32>
    %97 = arith.mulf %91, %96 : vector<1x32xf32>
    %c2_55 = arith.constant 2 : index
    %c0_56 = arith.constant 0 : index
    %98 = vector.load %arg14[%c2_55, %c0_56] : memref<8x32xf32, #tpu.memory_space<vmem>>, vector<1x32xf32>
    tpu.vector_store %arg14[%c2_55, %c0_56], %97 {strides = array<i32>} : memref<8x32xf32, #tpu.memory_space<vmem>>, vector<1x32xf32>,
    %c3_57 = arith.constant 3 : index
    %c0_58 = arith.constant 0 : index
    %99 = vector.load %arg13[%c3_57, %c0_58] : memref<8x128xf32, #tpu.memory_space<vmem>>, vector<1x128xf32>
    %100 = arith.truncf %97 : vector<1x32xf32> to vector<1x32xbf16>
    %cst_59 = arith.constant dense<0.000000e+00> : vector<1x128xf32>
    %101 = tpu.matmul %100, %39, %cst_59 {dimension_numbers = #tpu.dot_dimension_numbers<[1], [0], [0], [1], [0, 0, 1, 1], [], []>} : vector<1x32xbf16>, vector<32x128xbf16>, vector<1x128xf32> -> vector<1x128xf32>
    %102 = arith.addf %99, %101 : vector<1x128xf32>
    %103 = math.tanh %102 : vector<1x128xf32>
    %104 = arith.mulf %103, %42 : vector<1x128xf32>
    %105 = arith.addf %104, %45 : vector<1x128xf32>
    %106 = vector.extract_strided_slice %105 {offsets = [0, 0], sizes = [1, 32], strides = [1, 1]} : vector<1x128xf32> to vector<1x32xf32>
    %107 = vector.extract_strided_slice %105 {offsets = [0, 32], sizes = [1, 32], strides = [1, 1]} : vector<1x128xf32> to vector<1x32xf32>
    %108 = vector.extract_strided_slice %105 {offsets = [0, 64], sizes = [1, 32], strides = [1, 1]} : vector<1x128xf32> to vector<1x32xf32>
    %109 = vector.extract_strided_slice %105 {offsets = [0, 96], sizes = [1, 32], strides = [1, 1]} : vector<1x128xf32> to vector<1x32xf32>
    %110 = arith.mulf %106, %95 : vector<1x32xf32>
    %111 = arith.mulf %107, %109 : vector<1x32xf32>
    %112 = arith.addf %110, %111 : vector<1x32xf32>
    %113 = math.tanh %112 : vector<1x32xf32>
    %114 = arith.mulf %108, %113 : vector<1x32xf32>
    %c3_60 = arith.constant 3 : index
    %c0_61 = arith.constant 0 : index
    %115 = vector.load %arg14[%c3_60, %c0_61] : memref<8x32xf32, #tpu.memory_space<vmem>>, vector<1x32xf32>
    tpu.vector_store %arg14[%c3_60, %c0_61], %114 {strides = array<i32>} : memref<8x32xf32, #tpu.memory_space<vmem>>, vector<1x32xf32>,
    %c4_62 = arith.constant 4 : index
    %c0_63 = arith.constant 0 : index
    %116 = vector.load %arg13[%c4_62, %c0_63] : memref<8x128xf32, #tpu.memory_space<vmem>>, vector<1x128xf32>
    %117 = arith.truncf %114 : vector<1x32xf32> to vector<1x32xbf16>
    %cst_64 = arith.constant dense<0.000000e+00> : vector<1x128xf32>
    %118 = tpu.matmul %117, %39, %cst_64 {dimension_numbers = #tpu.dot_dimension_numbers<[1], [0], [0], [1], [0, 0, 1, 1], [], []>} : vector<1x32xbf16>, vector<32x128xbf16>, vector<1x128xf32> -> vector<1x128xf32>
    %119 = arith.addf %116, %118 : vector<1x128xf32>
    %120 = math.tanh %119 : vector<1x128xf32>
    %121 = arith.mulf %120, %42 : vector<1x128xf32>
    %122 = arith.addf %121, %45 : vector<1x128xf32>
    %123 = vector.extract_strided_slice %122 {offsets = [0, 0], sizes = [1, 32], strides = [1, 1]} : vector<1x128xf32> to vector<1x32xf32>
    %124 = vector.extract_strided_slice %122 {offsets = [0, 32], sizes = [1, 32], strides = [1, 1]} : vector<1x128xf32> to vector<1x32xf32>
    %125 = vector.extract_strided_slice %122 {offsets = [0, 64], sizes = [1, 32], strides = [1, 1]} : vector<1x128xf32> to vector<1x32xf32>
    %126 = vector.extract_strided_slice %122 {offsets = [0, 96], sizes = [1, 32], strides = [1, 1]} : vector<1x128xf32> to vector<1x32xf32>
    %127 = arith.mulf %123, %112 : vector<1x32xf32>
    %128 = arith.mulf %124, %126 : vector<1x32xf32>
    %129 = arith.addf %127, %128 : vector<1x32xf32>
    %130 = math.tanh %129 : vector<1x32xf32>
    %131 = arith.mulf %125, %130 : vector<1x32xf32>
    %c4_65 = arith.constant 4 : index
    %c0_66 = arith.constant 0 : index
    %132 = vector.load %arg14[%c4_65, %c0_66] : memref<8x32xf32, #tpu.memory_space<vmem>>, vector<1x32xf32>
    tpu.vector_store %arg14[%c4_65, %c0_66], %131 {strides = array<i32>} : memref<8x32xf32, #tpu.memory_space<vmem>>, vector<1x32xf32>,
    %c5_67 = arith.constant 5 : index
    %c0_68 = arith.constant 0 : index
    %133 = vector.load %arg13[%c5_67, %c0_68] : memref<8x128xf32, #tpu.memory_space<vmem>>, vector<1x128xf32>
    %134 = arith.truncf %131 : vector<1x32xf32> to vector<1x32xbf16>
    %cst_69 = arith.constant dense<0.000000e+00> : vector<1x128xf32>
    %135 = tpu.matmul %134, %39, %cst_69 {dimension_numbers = #tpu.dot_dimension_numbers<[1], [0], [0], [1], [0, 0, 1, 1], [], []>} : vector<1x32xbf16>, vector<32x128xbf16>, vector<1x128xf32> -> vector<1x128xf32>
    %136 = arith.addf %133, %135 : vector<1x128xf32>
    %137 = math.tanh %136 : vector<1x128xf32>
    %138 = arith.mulf %137, %42 : vector<1x128xf32>
    %139 = arith.addf %138, %45 : vector<1x128xf32>
    %140 = vector.extract_strided_slice %139 {offsets = [0, 0], sizes = [1, 32], strides = [1, 1]} : vector<1x128xf32> to vector<1x32xf32>
    %141 = vector.extract_strided_slice %139 {offsets = [0, 32], sizes = [1, 32], strides = [1, 1]} : vector<1x128xf32> to vector<1x32xf32>
    %142 = vector.extract_strided_slice %139 {offsets = [0, 64], sizes = [1, 32], strides = [1, 1]} : vector<1x128xf32> to vector<1x32xf32>
    %143 = vector.extract_strided_slice %139 {offsets = [0, 96], sizes = [1, 32], strides = [1, 1]} : vector<1x128xf32> to vector<1x32xf32>
    %144 = arith.mulf %140, %129 : vector<1x32xf32>
    %145 = arith.mulf %141, %143 : vector<1x32xf32>
    %146 = arith.addf %144, %145 : vector<1x32xf32>
    %147 = math.tanh %146 : vector<1x32xf32>
    %148 = arith.mulf %142, %147 : vector<1x32xf32>
    %c5_70 = arith.constant 5 : index
    %c0_71 = arith.constant 0 : index
    %149 = vector.load %arg14[%c5_70, %c0_71] : memref<8x32xf32, #tpu.memory_space<vmem>>, vector<1x32xf32>
    tpu.vector_store %arg14[%c5_70, %c0_71], %148 {strides = array<i32>} : memref<8x32xf32, #tpu.memory_space<vmem>>, vector<1x32xf32>,
    %c6_72 = arith.constant 6 : index
    %c0_73 = arith.constant 0 : index
    %150 = vector.load %arg13[%c6_72, %c0_73] : memref<8x128xf32, #tpu.memory_space<vmem>>, vector<1x128xf32>
    %151 = arith.truncf %148 : vector<1x32xf32> to vector<1x32xbf16>
    %cst_74 = arith.constant dense<0.000000e+00> : vector<1x128xf32>
    %152 = tpu.matmul %151, %39, %cst_74 {dimension_numbers = #tpu.dot_dimension_numbers<[1], [0], [0], [1], [0, 0, 1, 1], [], []>} : vector<1x32xbf16>, vector<32x128xbf16>, vector<1x128xf32> -> vector<1x128xf32>
    %153 = arith.addf %150, %152 : vector<1x128xf32>
    %154 = math.tanh %153 : vector<1x128xf32>
    %155 = arith.mulf %154, %42 : vector<1x128xf32>
    %156 = arith.addf %155, %45 : vector<1x128xf32>
    %157 = vector.extract_strided_slice %156 {offsets = [0, 0], sizes = [1, 32], strides = [1, 1]} : vector<1x128xf32> to vector<1x32xf32>
    %158 = vector.extract_strided_slice %156 {offsets = [0, 32], sizes = [1, 32], strides = [1, 1]} : vector<1x128xf32> to vector<1x32xf32>
    %159 = vector.extract_strided_slice %156 {offsets = [0, 64], sizes = [1, 32], strides = [1, 1]} : vector<1x128xf32> to vector<1x32xf32>
    %160 = vector.extract_strided_slice %156 {offsets = [0, 96], sizes = [1, 32], strides = [1, 1]} : vector<1x128xf32> to vector<1x32xf32>
    %161 = arith.mulf %157, %146 : vector<1x32xf32>
    %162 = arith.mulf %158, %160 : vector<1x32xf32>
    %163 = arith.addf %161, %162 : vector<1x32xf32>
    %164 = math.tanh %163 : vector<1x32xf32>
    %165 = arith.mulf %159, %164 : vector<1x32xf32>
    %c6_75 = arith.constant 6 : index
    %c0_76 = arith.constant 0 : index
    %166 = vector.load %arg14[%c6_75, %c0_76] : memref<8x32xf32, #tpu.memory_space<vmem>>, vector<1x32xf32>
    tpu.vector_store %arg14[%c6_75, %c0_76], %165 {strides = array<i32>} : memref<8x32xf32, #tpu.memory_space<vmem>>, vector<1x32xf32>,
    %c7_77 = arith.constant 7 : index
    %c0_78 = arith.constant 0 : index
    %167 = vector.load %arg13[%c7_77, %c0_78] : memref<8x128xf32, #tpu.memory_space<vmem>>, vector<1x128xf32>
    %168 = arith.truncf %165 : vector<1x32xf32> to vector<1x32xbf16>
    %cst_79 = arith.constant dense<0.000000e+00> : vector<1x128xf32>
    %169 = tpu.matmul %168, %39, %cst_79 {dimension_numbers = #tpu.dot_dimension_numbers<[1], [0], [0], [1], [0, 0, 1, 1], [], []>} : vector<1x32xbf16>, vector<32x128xbf16>, vector<1x128xf32> -> vector<1x128xf32>
    %170 = arith.addf %167, %169 : vector<1x128xf32>
    %171 = math.tanh %170 : vector<1x128xf32>
    %172 = arith.mulf %171, %42 : vector<1x128xf32>
    %173 = arith.addf %172, %45 : vector<1x128xf32>
    %174 = vector.extract_strided_slice %173 {offsets = [0, 0], sizes = [1, 32], strides = [1, 1]} : vector<1x128xf32> to vector<1x32xf32>
    %175 = vector.extract_strided_slice %173 {offsets = [0, 32], sizes = [1, 32], strides = [1, 1]} : vector<1x128xf32> to vector<1x32xf32>
    %176 = vector.extract_strided_slice %173 {offsets = [0, 64], sizes = [1, 32], strides = [1, 1]} : vector<1x128xf32> to vector<1x32xf32>
    %177 = vector.extract_strided_slice %173 {offsets = [0, 96], sizes = [1, 32], strides = [1, 1]} : vector<1x128xf32> to vector<1x32xf32>
    %178 = arith.mulf %174, %163 : vector<1x32xf32>
    %179 = arith.mulf %175, %177 : vector<1x32xf32>
    %180 = arith.addf %178, %179 : vector<1x32xf32>
    %181 = math.tanh %180 : vector<1x32xf32>
    %182 = arith.mulf %176, %181 : vector<1x32xf32>
    %c7_80 = arith.constant 7 : index
    %c0_81 = arith.constant 0 : index
    %183 = vector.load %arg14[%c7_80, %c0_81] : memref<8x32xf32, #tpu.memory_space<vmem>>, vector<1x32xf32>
    tpu.vector_store %arg14[%c7_80, %c0_81], %182 {strides = array<i32>} : memref<8x32xf32, #tpu.memory_space<vmem>>, vector<1x32xf32>,
    %c0_82 = arith.constant 0 : index
    %c0_83 = arith.constant 0 : index
    %184 = vector.load %arg14[%c0_82, %c0_83] : memref<8x32xf32, #tpu.memory_space<vmem>>, vector<8x32xf32>
    %c0_84 = arith.constant 0 : index
    %c0_85 = arith.constant 0 : index
    %185 = vector.load %arg5[%c0_84, %c0_85] : memref<32x128xf32, #tpu.memory_space<vmem>>, vector<32x128xf32>
    %cst_86 = arith.constant dense<0.000000e+00> : vector<8x128xf32>
    %186 = tpu.matmul %184, %185, %cst_86 {dimension_numbers = #tpu.dot_dimension_numbers<[1], [0], [0], [1], [0, 0, 1, 1], [], []>} : vector<8x32xf32>, vector<32x128xf32>, vector<8x128xf32> -> vector<8x128xf32>
    %c0_87 = arith.constant 0 : index
    %c0_88 = arith.constant 0 : index
    %187 = vector.load %arg6[%c0_87, %c0_88] : memref<1x128xf32, #tpu.memory_space<vmem>>, vector<1x128xf32>
    %188 = vector.broadcast %187 : vector<1x128xf32> to vector<8x128xf32>
    %189 = arith.addf %186, %188 : vector<8x128xf32>
    %c0_89 = arith.constant 0 : index
    %c0_90 = arith.constant 0 : index
    %190 = vector.load %arg9[%c0_89, %c0_90] : memref<8x128xf32, #tpu.memory_space<vmem>>, vector<8x128xf32>
    tpu.vector_store %arg9[%c0_89, %c0_90], %189 {strides = array<i32>} : memref<8x128xf32, #tpu.memory_space<vmem>>, vector<8x128xf32>,
    %c0_91 = arith.constant 0 : index
    %c0_92 = arith.constant 0 : index
    %191 = vector.load %arg10[%c0_91, %c0_92] : memref<1x32xf32, #tpu.memory_space<vmem>>, vector<1x32xf32>
    tpu.vector_store %arg10[%c0_91, %c0_92], %182 {strides = array<i32>} : memref<1x32xf32, #tpu.memory_space<vmem>>, vector<1x32xf32>,
    %c0_93 = arith.constant 0 : index
    %c0_94 = arith.constant 0 : index
    %192 = vector.load %arg11[%c0_93, %c0_94] : memref<1x32xf32, #tpu.memory_space<vmem>>, vector<1x32xf32>
    tpu.vector_store %arg11[%c0_93, %c0_94], %180 {strides = array<i32>} : memref<1x32xf32, #tpu.memory_space<vmem>>, vector<1x32xf32>,
    return
  }
}

</mosaic_0001>

<llo_original>
// kernel: tpu_custom_call.1
$region0: #{tpu_custom_call.1}
  #allocation0 [shape = 'u32[]', space=smem, size = 0x4, offset = 0x4, fixed_abs, tag = 'smem constant byte address 0x4 - core index']
  #allocation1 [shape = 'u32[72,128]{1,0:T(1,128)}', space=vmem, size = 0x9000, scoped, tag = 'internal scratch']
  #allocation2 [shape = 'f32[8,16]{1,0:T(8,128)}', space=vmem, size = 0x1000, scoped, tag = 'scratch operand']
  #allocation3 [shape = 'f32[8,128]{1,0:T(8,128)}', space=vmem, size = 0x1000, scoped, tag = 'scratch operand']
  #allocation4 [shape = 'f32[8,32]{1,0:T(8,128)}', space=vmem, size = 0x1000, scoped, tag = 'scratch operand']
  #allocation5 [shape = 's32[1]{0}', space=sflag, size = 0x4, scoped, tag = 'scoped memory for tpu_custom_call.1']
  #allocation6 [shape = 'u8[512]{0}', space=smem, size = 0x200, scoped, tag = 'prefetched SMEM operand 0']
  %s0 = inlined_call_operand.vmem [shape: s32[8], index: 0, kind: input, shape index: {}]
  %s1 = inlined_call_operand.vmem [shape: f32[64,16], index: 1, kind: input, shape index: {}]
  %s2 = inlined_call_operand.vmem [shape: f32[16,128], index: 2, kind: input, shape index: {}]
  %s3 = inlined_call_operand.vmem [shape: bf16[32,128], index: 3, kind: input, shape index: {}]
  %s4 = inlined_call_operand.vmem [shape: f32[1,128], index: 4, kind: input, shape index: {}]
  %s5 = inlined_call_operand.vmem [shape: f32[32,128], index: 5, kind: input, shape index: {}]
  %s6 = inlined_call_operand.vmem [shape: f32[1,128], index: 6, kind: input, shape index: {}]
  %s7 = inlined_call_operand.vmem [shape: f32[1,32], index: 7, kind: input, shape index: {}]
  %s8 = inlined_call_operand.vmem [shape: f32[1,32], index: 8, kind: input, shape index: {}]
  %s9 = inlined_call_operand.hbm [shape: f32[8,128], index: 9, kind: output, shape index: {0}]
  %s10 = inlined_call_operand.hbm [shape: f32[1,32], index: 10, kind: output, shape index: {1}]
  %s11 = inlined_call_operand.hbm [shape: f32[1,32], index: 11, kind: output, shape index: {2}]
  %12 = xla_tuple %s9, %s10, %s11
  %s13 = sld [smem:[#allocation0]]
  $region58: #{tpu_custom_call.1} parent=0
    _
  %s15 = ssub.s32 1, %s13
  %s16 = scalar_select 0, %s15, %s13
  %s18 = sshll.u32 %s0, 4
  %s19 = int_to_ptr.vmem [resolvable:$true] %s18
  %21 = dma.vmem_to_smem %s19, 16, [#allocation6], [#allocation5]
  %23 = dma.done [#allocation5], 16
  %24 = sfence
  $region1: #{tpu_custom_call.1} parent=0
    #allocation7 [shape = 'u8[4096]{0}', space=vmem, size = 0x1000, scoped, tag = 'output window, operand 0, single buffered']
    #allocation8 [shape = 's32[1]{0}', space=sflag, size = 0x4, scoped, tag = 'scoped memory for tpu_custom_call.1']
    #allocation9 [shape = 'u8[512]{0}', space=vmem, size = 0x400, scoped, tag = 'output window, operand 1, single buffered']
    #allocation10 [shape = 's32[1]{0}', space=sflag, size = 0x4, scoped, tag = 'scoped memory for tpu_custom_call.1']
    #allocation11 [shape = 'u8[512]{0}', space=vmem, size = 0x400, scoped, tag = 'output window, operand 2, single buffered']
    %25 = vsyncpa [#allocation8], 0
    %26 = vsyncpa [#allocation10], 0
    // Predicated region
    $region2: #{tpu_custom_call.1} parent=1 // pred_check
      _
    $region3: #{tpu_custom_call.1} parent=1 // pred_check_branch
      %28 = sbr.rel (0) target = $region5
    $region4: #{tpu_custom_call.1} parent=1 // pred_region
      _
    $region5: #{tpu_custom_call.1} parent=1 // pred_fallthru
      _
    // Predicated region
    $region6: #{tpu_custom_call.1} parent=1 // pred_check
      _
    $region7: #{tpu_custom_call.1} parent=1 // pred_check_branch
      %30 = sbr.rel (0) target = $region9
    $region8: #{tpu_custom_call.1} parent=1 // pred_region
      _
    $region9: #{tpu_custom_call.1} parent=1 // pred_fallthru
      _
    // Predicated region
    $region10: #{tpu_custom_call.1} parent=1 // pred_check
      _
    $region11: #{tpu_custom_call.1} parent=1 // pred_check_branch
      %32 = sbr.rel (0) target = $region13
    $region12: #{tpu_custom_call.1} parent=1 // pred_region
      _
    $region13: #{tpu_custom_call.1} parent=1 // pred_fallthru
      _
    // Predicated region
    $region14: #{tpu_custom_call.1} parent=1 // pred_check
      _
    $region15: #{tpu_custom_call.1} parent=1 // pred_check_branch
      %34 = sbr.rel (0) target = $region17
    $region16: #{tpu_custom_call.1} parent=1 // pred_region
      _
    $region17: #{tpu_custom_call.1} parent=1 // pred_fallthru
      _
    // Predicated region
    $region18: #{tpu_custom_call.1} parent=1 // pred_check
      _
    $region19: #{tpu_custom_call.1} parent=1 // pred_check_branch
      %36 = sbr.rel (0) target = $region21
    $region20: #{tpu_custom_call.1} parent=1 // pred_region
      _
    $region21: #{tpu_custom_call.1} parent=1 // pred_fallthru
      _
    // Predicated region
    $region22: #{tpu_custom_call.1} parent=1 // pred_check
      _
    $region23: #{tpu_custom_call.1} parent=1 // pred_check_branch
      %38 = sbr.rel (0) target = $region25
    $region24: #{tpu_custom_call.1} parent=1 // pred_region
      _
    $region25: #{tpu_custom_call.1} parent=1 // pred_fallthru
      _
    // Predicated region
    $region26: #{tpu_custom_call.1} parent=1 // pred_check
      _
    $region27: #{tpu_custom_call.1} parent=1 // pred_check_branch
      %40 = sbr.rel (0) target = $region29
    $region28: #{tpu_custom_call.1} parent=1 // pred_region
      _
    $region29: #{tpu_custom_call.1} parent=1 // pred_fallthru
      _
    // Predicated region
    $region30: #{tpu_custom_call.1} parent=1 // pred_check
      _
    $region31: #{tpu_custom_call.1} parent=1 // pred_check_branch
      %42 = sbr.rel (0) target = $region33
    $region32: #{tpu_custom_call.1} parent=1 // pred_region
      _
    $region33: #{tpu_custom_call.1} parent=1 // pred_fallthru
      _
    %s44 = sld [smem:[#allocation6]]
    %s45 = scalar_lea.vmem %s1, %s44
    %v46 = vld [vmem:[%s45] sm:$0x1]
    %vm47 = vcmask 122880
    %48 = vst.msk [vmem:[#allocation2] sm:$0x1] %vm47, %v46
    %s49 = sld [smem:[#allocation6 + $0x1]]
    %s50 = scalar_lea.vmem %s1, %s49
    %v51 = vld [vmem:[%s50] sm:$0x1]
    %52 = vst.msk [vmem:[#allocation2 + $0x1] sm:$0x1] %vm47, %v51
    %s53 = sld [smem:[#allocation6 + $0x2]]
    %s54 = scalar_lea.vmem %s1, %s53
    %v55 = vld [vmem:[%s54] sm:$0x1]
    %56 = vst.msk [vmem:[#allocation2 + $0x2] sm:$0x1] %vm47, %v55
    %s57 = sld [smem:[#allocation6 + $0x3]]
    %s58 = scalar_lea.vmem %s1, %s57
    %v59 = vld [vmem:[%s58] sm:$0x1]
    %60 = vst.msk [vmem:[#allocation2 + $0x3] sm:$0x1] %vm47, %v59
    %s61 = sld [smem:[#allocation6 + $0x4]]
    %s62 = scalar_lea.vmem %s1, %s61
    %v63 = vld [vmem:[%s62] sm:$0x1]
    %64 = vst.msk [vmem:[#allocation2 + $0x4] sm:$0x1] %vm47, %v63
    %s65 = sld [smem:[#allocation6 + $0x5]]
    %s66 = scalar_lea.vmem %s1, %s65
    %v67 = vld [vmem:[%s66] sm:$0x1]
    %68 = vst.msk [vmem:[#allocation2 + $0x5] sm:$0x1] %vm47, %v67
    %s69 = sld [smem:[#allocation6 + $0x6]]
    %s70 = scalar_lea.vmem %s1, %s69
    %v71 = vld [vmem:[%s70] sm:$0x1]
    %72 = vst.msk [vmem:[#allocation2 + $0x6] sm:$0x1] %vm47, %v71
    %s73 = sld [smem:[#allocation6 + $0x7]]
    %s74 = scalar_lea.vmem %s1, %s73
    %v75 = vld [vmem:[%s74] sm:$0x1]
    %76 = vst.msk [vmem:[#allocation2 + $0x7] sm:$0x1] %vm47, %v75
    %v77 = vld [vmem:[#allocation2] sm:$0xff]
    %v78 = vld [vmem:[%s2] sm:$0xff]
    %v79 = vld [vmem:[%s2 + $0x8] sm:$0xff]
    %v80 = vld [vmem:[%s4] sm:$0x1]
    %v82 = vperm.slane %v80, 0
    %vm84 = vcmask 130048
    %v86 = vsel %vm84, %v77, 0
    %88 = vmatpush.msra.mxu0 0.0
    %89 = vmatpush.msra.mxu0 0.0
    %90 = vmatpush.msra.mxu0 0.0
    %91 = vmatpush.msra.mxu0 0.0
    %92 = vmatpush.msra.mxu0 0.0
    %93 = vmatpush.msra.mxu0 0.0
    %94 = vmatpush.msra.mxu0 0.0
    %95 = vmatpush.msra.mxu0 0.0
    %96 = vmatpush.msra.mxu0 0.0
    %97 = vmatpush.msra.mxu0 0.0
    %98 = vmatpush.msra.mxu0 0.0
    %99 = vmatpush.msra.mxu0 0.0
    %100 = vmatpush.msra.mxu0 0.0
    %101 = vmatpush.msra.mxu0 0.0
    %102 = vmatpush.msra.mxu0 %v79
    %103 = vmatpush.msra.mxu0 %v78
    %104 = vmatmul.f32.gmra.mxu0 %v86
    %v105 = vpop.f32.mrf.mxu0
    %v106 = vadd.f32 %v82, %v105
    %107 = vdwg.mxu0
    %108 = vst [vmem:[#allocation3] sm:$0xff] %v106
    %v109 = vld [vmem:[%s3] sm:$0xf]
    %v110 = vld [vmem:[%s3 + $0x4] sm:$0xf]
    %v111 = vld [vmem:[%s3 + $0x8] sm:$0xf]
    %v112 = vld [vmem:[%s3 + $0xc] sm:$0xf]
    %vm113 = vcmask 785408
    %v114 = vsel %vm113, 0.5, 1.0
    %v115 = vsel %vm113, 0.5, 0.0
    %v116 = vld [vmem:[%s7] sm:$0x1]
    %v117 = vld [vmem:[%s8] sm:$0x1]
    %v118 = vld [vmem:[#allocation3] sm:$0x1]
    %v119 = vpack.c.bf16 %v116, %v116
    %v124 = vunpack.c.l.b16 %v109
    %v125 = vunpack.c.l.b16 %v110
    %v126 = vunpack.c.l.b16 %v111
    %v127 = vunpack.c.l.b16 %v112
    %v128 = vpack.c.b16 %v125, %v124
    %v129 = vpack.c.b16 %v127, %v126
    %vm132 = vcmask 261120
    %v134 = vsel %vm132, %v119, 0
    %136 = vmatpush.bf16.msra.mxu0 0
    %137 = vmatpush.bf16.msra.mxu0 0
    %138 = vmatpush.bf16.msra.mxu0 0
    %139 = vmatpush.bf16.msra.mxu0 0
    %140 = vmatpush.bf16.msra.mxu0 0
    %141 = vmatpush.bf16.msra.mxu0 0
    %142 = vmatpush.bf16.msra.mxu0 %v129
    %143 = vmatpush.bf16.msra.mxu0 %v128
    %144 = vmatmul.bf16.gmra.mxu0 %v134
    %v145 = vpop.f32.mrf.mxu0
    %v146 = vadd.f32 0.0, %v145
    %v147 = vpop.f32.mrf.mxu0
    %148 = vdwg.mxu0
    %v149 = vadd.f32 %v118, %v146
    %v150 = vtanh.pop %v149
    %v151 = vmul.f32 %v150, %v114
    %v152 = vadd.f32 %v151, %v115
    %v153 = vmul.f32 %v152, %v117
    %155 = vrot.lane.b32.xlu0 %v152, 64
    %v156 = vpop.permute.xlu0 %155
    %v158 = vmul.f32 %v152, %v156
    %160 = vrot.lane.b32.xlu0 %v158, 96
    %v161 = vpop.permute.xlu0 %160
    %v163 = vadd.f32 %v153, %v161
    %v164 = vtanh.pop %v163
    %166 = vrot.lane.b32.xlu0 %v164, 64
    %v167 = vpop.permute.xlu0 %166
    %v169 = vmul.f32 %v152, %v167
    %171 = vrot.lane.b32.xlu0 %v169, 64
    %v172 = vpop.permute.xlu0 %171
    %vm174 = vcmask 253952
    %175 = vst.msk [vmem:[#allocation4] sm:$0x1] %vm174, %v172
    %v176 = vld [vmem:[#allocation3 + $0x1] sm:$0x1]
    %v177 = vpack.c.bf16 %v169, %v169
    %179 = vrot.lane.b32.xlu0 %v177, 64
    %v180 = vpop.permute.xlu0 %179
    %v182 = vsel %vm132, %v180, 0
    %184 = vmatpush.bf16.msra.mxu0 0
    %185 = vmatpush.bf16.msra.mxu0 0
    %186 = vmatpush.bf16.msra.mxu0 0
    %187 = vmatpush.bf16.msra.mxu0 0
    %188 = vmatpush.bf16.msra.mxu0 0
    %189 = vmatpush.bf16.msra.mxu0 0
    %190 = vmatpush.bf16.msra.mxu0 %v129
    %191 = vmatpush.bf16.msra.mxu0 %v128
    %192 = vmatmul.bf16.gmra.mxu0 %v182
    %v193 = vpop.f32.mrf.mxu0
    %v194 = vadd.f32 0.0, %v193
    %v195 = vpop.f32.mrf.mxu0
    %196 = vdwg.mxu0
    %v197 = vadd.f32 %v176, %v194
    %v198 = vtanh.pop %v197
    %v199 = vmul.f32 %v198, %v114
    %v200 = vadd.f32 %v199, %v115
    %v201 = vmul.f32 %v200, %v163
    %203 = vrot.lane.b32.xlu0 %v200, 64
    %v204 = vpop.permute.xlu0 %203
    %v206 = vmul.f32 %v200, %v204
    %208 = vrot.lane.b32.xlu0 %v206, 96
    %v209 = vpop.permute.xlu0 %208
    %v211 = vadd.f32 %v201, %v209
    %v212 = vtanh.pop %v211
    %214 = vrot.lane.b32.xlu0 %v212, 64
    %v215 = vpop.permute.xlu0 %214
    %v217 = vmul.f32 %v200, %v215
    %219 = vrot.lane.b32.xlu0 %v217, 64
    %v220 = vpop.permute.xlu0 %219
    %222 = vst.msk [vmem:[#allocation4 + $0x1] sm:$0x1] %vm174, %v220
    %v223 = vld [vmem:[#allocation3 + $0x2] sm:$0x1]
    %v224 = vpack.c.bf16 %v217, %v217
    %226 = vrot.lane.b32.xlu0 %v224, 64
    %v227 = vpop.permute.xlu0 %226
    %v229 = vsel %vm132, %v227, 0
    %231 = vmatpush.bf16.msra.mxu0 0
    %232 = vmatpush.bf16.msra.mxu0 0
    %233 = vmatpush.bf16.msra.mxu0 0
    %234 = vmatpush.bf16.msra.mxu0 0
    %235 = vmatpush.bf16.msra.mxu0 0
    %236 = vmatpush.bf16.msra.mxu0 0
    %237 = vmatpush.bf16.msra.mxu0 %v129
    %238 = vmatpush.bf16.msra.mxu0 %v128
    %239 = vmatmul.bf16.gmra.mxu0 %v229
    %v240 = vpop.f32.mrf.mxu0
    %v241 = vadd.f32 0.0, %v240
    %v242 = vpop.f32.mrf.mxu0
    %243 = vdwg.mxu0
    %v244 = vadd.f32 %v223, %v241
    %v245 = vtanh.pop %v244
    %v246 = vmul.f32 %v245, %v114
    %v247 = vadd.f32 %v246, %v115
    %v248 = vmul.f32 %v247, %v211
    %250 = vrot.lane.b32.xlu0 %v247, 64
    %v251 = vpop.permute.xlu0 %250
    %v253 = vmul.f32 %v247, %v251
    %255 = vrot.lane.b32.xlu0 %v253, 96
    %v256 = vpop.permute.xlu0 %255
    %v258 = vadd.f32 %v248, %v256
    %v259 = vtanh.pop %v258
    %261 = vrot.lane.b32.xlu0 %v259, 64
    %v262 = vpop.permute.xlu0 %261
    %v264 = vmul.f32 %v247, %v262
    %266 = vrot.lane.b32.xlu0 %v264, 64
    %v267 = vpop.permute.xlu0 %266
    %269 = vst.msk [vmem:[#allocation4 + $0x2] sm:$0x1] %vm174, %v267
    %v270 = vld [vmem:[#allocation3 + $0x3] sm:$0x1]
    %v271 = vpack.c.bf16 %v264, %v264
    %273 = vrot.lane.b32.xlu0 %v271, 64
    %v274 = vpop.permute.xlu0 %273
    %v276 = vsel %vm132, %v274, 0
    %278 = vmatpush.bf16.msra.mxu0 0
    %279 = vmatpush.bf16.msra.mxu0 0
    %280 = vmatpush.bf16.msra.mxu0 0
    %281 = vmatpush.bf16.msra.mxu0 0
    %282 = vmatpush.bf16.msra.mxu0 0
    %283 = vmatpush.bf16.msra.mxu0 0
    %284 = vmatpush.bf16.msra.mxu0 %v129
    %285 = vmatpush.bf16.msra.mxu0 %v128
    %286 = vmatmul.bf16.gmra.mxu0 %v276
    %v287 = vpop.f32.mrf.mxu0
    %v288 = vadd.f32 0.0, %v287
    %v289 = vpop.f32.mrf.mxu0
    %290 = vdwg.mxu0
    %v291 = vadd.f32 %v270, %v288
    %v292 = vtanh.pop %v291
    %v293 = vmul.f32 %v292, %v114
    %v294 = vadd.f32 %v293, %v115
    %v295 = vmul.f32 %v294, %v258
    %297 = vrot.lane.b32.xlu0 %v294, 64
    %v298 = vpop.permute.xlu0 %297
    %v300 = vmul.f32 %v294, %v298
    %302 = vrot.lane.b32.xlu0 %v300, 96
    %v303 = vpop.permute.xlu0 %302
    %v305 = vadd.f32 %v295, %v303
    %v306 = vtanh.pop %v305
    %308 = vrot.lane.b32.xlu0 %v306, 64
    %v309 = vpop.permute.xlu0 %308
    %v311 = vmul.f32 %v294, %v309
    %313 = vrot.lane.b32.xlu0 %v311, 64
    %v314 = vpop.permute.xlu0 %313
    %316 = vst.msk [vmem:[#allocation4 + $0x3] sm:$0x1] %vm174, %v314
    %v317 = vld [vmem:[#allocation3 + $0x4] sm:$0x1]
    %v318 = vpack.c.bf16 %v311, %v311
    %320 = vrot.lane.b32.xlu0 %v318, 64
    %v321 = vpop.permute.xlu0 %320
    %v323 = vsel %vm132, %v321, 0
    %325 = vmatpush.bf16.msra.mxu0 0
    %326 = vmatpush.bf16.msra.mxu0 0
    %327 = vmatpush.bf16.msra.mxu0 0
    %328 = vmatpush.bf16.msra.mxu0 0
    %329 = vmatpush.bf16.msra.mxu0 0
    %330 = vmatpush.bf16.msra.mxu0 0
    %331 = vmatpush.bf16.msra.mxu0 %v129
    %332 = vmatpush.bf16.msra.mxu0 %v128
    %333 = vmatmul.bf16.gmra.mxu0 %v323
    %v334 = vpop.f32.mrf.mxu0
    %v335 = vadd.f32 0.0, %v334
    %v336 = vpop.f32.mrf.mxu0
    %337 = vdwg.mxu0
    %v338 = vadd.f32 %v317, %v335
    %v339 = vtanh.pop %v338
    %v340 = vmul.f32 %v339, %v114
    %v341 = vadd.f32 %v340, %v115
    %v342 = vmul.f32 %v341, %v305
    %344 = vrot.lane.b32.xlu0 %v341, 64
    %v345 = vpop.permute.xlu0 %344
    %v347 = vmul.f32 %v341, %v345
    %349 = vrot.lane.b32.xlu0 %v347, 96
    %v350 = vpop.permute.xlu0 %349
    %v352 = vadd.f32 %v342, %v350
    %v353 = vtanh.pop %v352
    %355 = vrot.lane.b32.xlu0 %v353, 64
    %v356 = vpop.permute.xlu0 %355
    %v358 = vmul.f32 %v341, %v356
    %360 = vrot.lane.b32.xlu0 %v358, 64
    %v361 = vpop.permute.xlu0 %360
    %363 = vst.msk [vmem:[#allocation4 + $0x4] sm:$0x1] %vm174, %v361
    %v364 = vld [vmem:[#allocation3 + $0x5] sm:$0x1]
    %v365 = vpack.c.bf16 %v358, %v358
    %367 = vrot.lane.b32.xlu0 %v365, 64
    %v368 = vpop.permute.xlu0 %367
    %v370 = vsel %vm132, %v368, 0
    %372 = vmatpush.bf16.msra.mxu0 0
    %373 = vmatpush.bf16.msra.mxu0 0
    %374 = vmatpush.bf16.msra.mxu0 0
    %375 = vmatpush.bf16.msra.mxu0 0
    %376 = vmatpush.bf16.msra.mxu0 0
    %377 = vmatpush.bf16.msra.mxu0 0
    %378 = vmatpush.bf16.msra.mxu0 %v129
    %379 = vmatpush.bf16.msra.mxu0 %v128
    %380 = vmatmul.bf16.gmra.mxu0 %v370
    %v381 = vpop.f32.mrf.mxu0
    %v382 = vadd.f32 0.0, %v381
    %v383 = vpop.f32.mrf.mxu0
    %384 = vdwg.mxu0
    %v385 = vadd.f32 %v364, %v382
    %v386 = vtanh.pop %v385
    %v387 = vmul.f32 %v386, %v114
    %v388 = vadd.f32 %v387, %v115
    %v389 = vmul.f32 %v388, %v352
    %391 = vrot.lane.b32.xlu0 %v388, 64
    %v392 = vpop.permute.xlu0 %391
    %v394 = vmul.f32 %v388, %v392
    %396 = vrot.lane.b32.xlu0 %v394, 96
    %v397 = vpop.permute.xlu0 %396
    %v399 = vadd.f32 %v389, %v397
    %v400 = vtanh.pop %v399
    %402 = vrot.lane.b32.xlu0 %v400, 64
    %v403 = vpop.permute.xlu0 %402
    %v405 = vmul.f32 %v388, %v403
    %407 = vrot.lane.b32.xlu0 %v405, 64
    %v408 = vpop.permute.xlu0 %407
    %410 = vst.msk [vmem:[#allocation4 + $0x5] sm:$0x1] %vm174, %v408
    %v411 = vld [vmem:[#allocation3 + $0x6] sm:$0x1]
    %v412 = vpack.c.bf16 %v405, %v405
    %414 = vrot.lane.b32.xlu0 %v412, 64
    %v415 = vpop.permute.xlu0 %414
    %v417 = vsel %vm132, %v415, 0
    %419 = vmatpush.bf16.msra.mxu0 0
    %420 = vmatpush.bf16.msra.mxu0 0
    %421 = vmatpush.bf16.msra.mxu0 0
    %422 = vmatpush.bf16.msra.mxu0 0
    %423 = vmatpush.bf16.msra.mxu0 0
    %424 = vmatpush.bf16.msra.mxu0 0
    %425 = vmatpush.bf16.msra.mxu0 %v129
    %426 = vmatpush.bf16.msra.mxu0 %v128
    %427 = vmatmul.bf16.gmra.mxu0 %v417
    %v428 = vpop.f32.mrf.mxu0
    %v429 = vadd.f32 0.0, %v428
    %v430 = vpop.f32.mrf.mxu0
    %431 = vdwg.mxu0
    %v432 = vadd.f32 %v411, %v429
    %v433 = vtanh.pop %v432
    %v434 = vmul.f32 %v433, %v114
    %v435 = vadd.f32 %v434, %v115
    %v436 = vmul.f32 %v435, %v399
    %438 = vrot.lane.b32.xlu0 %v435, 64
    %v439 = vpop.permute.xlu0 %438
    %v441 = vmul.f32 %v435, %v439
    %443 = vrot.lane.b32.xlu0 %v441, 96
    %v444 = vpop.permute.xlu0 %443
    %v446 = vadd.f32 %v436, %v444
    %v447 = vtanh.pop %v446
    %449 = vrot.lane.b32.xlu0 %v447, 64
    %v450 = vpop.permute.xlu0 %449
    %v452 = vmul.f32 %v435, %v450
    %454 = vrot.lane.b32.xlu0 %v452, 64
    %v455 = vpop.permute.xlu0 %454
    %457 = vst.msk [vmem:[#allocation4 + $0x6] sm:$0x1] %vm174, %v455
    %v458 = vld [vmem:[#allocation3 + $0x7] sm:$0x1]
    %v459 = vpack.c.bf16 %v452, %v452
    %461 = vrot.lane.b32.xlu0 %v459, 64
    %v462 = vpop.permute.xlu0 %461
    %v464 = vsel %vm132, %v462, 0
    %466 = vmatpush.bf16.msra.mxu0 0
    %467 = vmatpush.bf16.msra.mxu0 0
    %468 = vmatpush.bf16.msra.mxu0 0
    %469 = vmatpush.bf16.msra.mxu0 0
    %470 = vmatpush.bf16.msra.mxu0 0
    %471 = vmatpush.bf16.msra.mxu0 0
    %472 = vmatpush.bf16.msra.mxu0 %v129
    %473 = vmatpush.bf16.msra.mxu0 %v128
    %474 = vmatmul.bf16.gmra.mxu0 %v464
    %v475 = vpop.f32.mrf.mxu0
    %v476 = vadd.f32 0.0, %v475
    %v477 = vpop.f32.mrf.mxu0
    %478 = vdwg.mxu0
    %v479 = vadd.f32 %v458, %v476
    %v480 = vtanh.pop %v479
    %v481 = vmul.f32 %v480, %v114
    %v482 = vadd.f32 %v481, %v115
    %v483 = vmul.f32 %v482, %v446
    %485 = vrot.lane.b32.xlu0 %v482, 64
    %v486 = vpop.permute.xlu0 %485
    %v488 = vmul.f32 %v482, %v486
    %490 = vrot.lane.b32.xlu0 %v488, 96
    %v491 = vpop.permute.xlu0 %490
    %v493 = vadd.f32 %v483, %v491
    %v494 = vtanh.pop %v493
    %496 = vrot.lane.b32.xlu0 %v494, 64
    %v497 = vpop.permute.xlu0 %496
    %v499 = vmul.f32 %v482, %v497
    %501 = vrot.lane.b32.xlu0 %v499, 64
    %v502 = vpop.permute.xlu0 %501
    %504 = vst.msk [vmem:[#allocation4 + $0x7] sm:$0x1] %vm174, %v502
    %v505 = vld [vmem:[#allocation4] sm:$0xff]
    %v506 = vld [vmem:[%s5] sm:$0xff]
    %v507 = vld [vmem:[%s5 + $0x8] sm:$0xff]
    %v508 = vld [vmem:[%s5 + $0x10] sm:$0xff]
    %v509 = vld [vmem:[%s5 + $0x18] sm:$0xff]
    %v510 = vld [vmem:[%s6] sm:$0x1]
    %v512 = vperm.slane %v510, 0
    %v515 = vsel %vm132, %v505, 0
    %517 = vmatpush.msra.mxu0 0.0
    %518 = vmatpush.msra.mxu0 0.0
    %519 = vmatpush.msra.mxu0 0.0
    %520 = vmatpush.msra.mxu0 0.0
    %521 = vmatpush.msra.mxu0 0.0
    %522 = vmatpush.msra.mxu0 0.0
    %523 = vmatpush.msra.mxu0 0.0
    %524 = vmatpush.msra.mxu0 0.0
    %525 = vmatpush.msra.mxu0 0.0
    %526 = vmatpush.msra.mxu0 0.0
    %527 = vmatpush.msra.mxu0 0.0
    %528 = vmatpush.msra.mxu0 0.0
    %529 = vmatpush.msra.mxu0 %v509
    %530 = vmatpush.msra.mxu0 %v508
    %531 = vmatpush.msra.mxu0 %v507
    %532 = vmatpush.msra.mxu0 %v506
    %533 = vmatmul.f32.gmra.mxu0 %v515
    %v534 = vpop.f32.mrf.mxu0
    %v535 = vadd.f32 %v512, %v534
    %536 = vdwg.mxu0
    %537 = vst [vmem:[#allocation7] sm:$0xff] %v535
    %538 = vst.msk [vmem:[#allocation9] sm:$0x1] %vm174, %v502
    %539 = vst.msk [vmem:[#allocation11] sm:$0x1] %vm174, %v493
    // Predicated region
    $region34: #{tpu_custom_call.1} parent=1 // pred_check
      _
    $region35: #{tpu_custom_call.1} parent=1 // pred_check_branch
      %541 = sbr.rel (0) target = $region37
    $region36: #{tpu_custom_call.1} parent=1 // pred_region
      %543 = vsyncadd [#allocation8], 0
      %s545 = sshll.u32 [#allocation7], 4
      %s546 = int_to_ptr.vmem [resolvable:$true] %s545
      %s547 = sshll.u32 %s9, 4
      %s548 = int_to_ptr.hbm [resolvable:$true] %s547
      %550 = dma.vmem_to_hbm [thread:$0]  %s546, 128, %s548, [#allocation8]
    $region37: #{tpu_custom_call.1} parent=1 // pred_fallthru
      _
    // Predicated region
    $region38: #{tpu_custom_call.1} parent=1 // pred_check
      _
    $region39: #{tpu_custom_call.1} parent=1 // pred_check_branch
      %552 = sbr.rel (0) target = $region41
    $region40: #{tpu_custom_call.1} parent=1 // pred_region
      %554 = vsyncadd [#allocation10], 0
      %s556 = sshll.u32 [#allocation9], 4
      %s557 = int_to_ptr.vmem [resolvable:$true] %s556
      %s558 = sshll.u32 %s10, 4
      %s559 = int_to_ptr.hbm [resolvable:$true] %s558
      %561 = dma.vmem_to_hbm [thread:$0]  %s557, 16, %s559, [#allocation10]
    $region41: #{tpu_custom_call.1} parent=1 // pred_fallthru
      _
    // Predicated region
    $region42: #{tpu_custom_call.1} parent=1 // pred_check
      _
    $region43: #{tpu_custom_call.1} parent=1 // pred_check_branch
      %563 = sbr.rel (0) target = $region45
    $region44: #{tpu_custom_call.1} parent=1 // pred_region
      %565 = vsyncadd [#allocation10], 0
      %s567 = sshll.u32 [#allocation11], 4
      %s568 = int_to_ptr.vmem [resolvable:$true] %s567
      %s569 = sshll.u32 %s11, 4
      %s570 = int_to_ptr.hbm [resolvable:$true] %s569
      %572 = dma.vmem_to_hbm [thread:$0]  %s568, 16, %s570, [#allocation10]
    $region45: #{tpu_custom_call.1} parent=1 // pred_fallthru
      _
    // Predicated region
    $region46: #{tpu_custom_call.1} parent=1 // pred_check
      _
    $region47: #{tpu_custom_call.1} parent=1 // pred_check_branch
      %574 = sbr.rel (0) target = $region49
    $region48: #{tpu_custom_call.1} parent=1 // pred_region
      %576 = dma.done [#allocation8], 128
    $region49: #{tpu_custom_call.1} parent=1 // pred_fallthru
      _
    // Predicated region
    $region50: #{tpu_custom_call.1} parent=1 // pred_check
      _
    $region51: #{tpu_custom_call.1} parent=1 // pred_check_branch
      %578 = sbr.rel (0) target = $region53
    $region52: #{tpu_custom_call.1} parent=1 // pred_region
      %580 = dma.done [#allocation10], 16
    $region53: #{tpu_custom_call.1} parent=1 // pred_fallthru
      _
    // Predicated region
    $region54: #{tpu_custom_call.1} parent=1 // pred_check
      _
    $region55: #{tpu_custom_call.1} parent=1 // pred_check_branch
      %582 = sbr.rel (0) target = $region57
    $region56: #{tpu_custom_call.1} parent=1 // pred_region
      %584 = dma.done [#allocation10], 16
    $region57: #{tpu_custom_call.1} parent=1 // pred_fallthru
      _
    %585 = vsyncpa [#allocation8], 1
    %586 = vsyncpa [#allocation10], 1

</llo_original>
